<compile_context>
chip_gen: v7x
topology: tpu7x:2x2x1
jax: 0.10.0
libtpu: 0.0.40
codegen_flags: <defaults>
</compile_context>

<pallas_src>
import functools

import jax
import jax.numpy as jnp
from jax.experimental import pallas as pl
from jax.experimental.pallas import tpu as pltpu


NEG_SLOPE = 0.01  # F.leaky_relu default


def _round_up(x, m):
    return ((x + m - 1) // m) * m


def _featconv_kernel(x_ref, w1_ref, w2_ref, b1_ref, b2_ref, o_ref, *,
                     compute_dtype, use_mxu):
    # x_ref: (C, T) channels-on-sublanes tile of pixels.
    # w1_ref: (O, 1), w2_ref: (O, C2), b1_ref/b2_ref: (O, 1), o_ref: (O, T).
    cd = compute_dtype
    x = x_ref[...].astype(cd)
    w1 = w1_ref[...].astype(cd)                   # (O, 1)
    w2 = w2_ref[...].astype(cd)                   # (O, C2)
    b1 = b1_ref[...].astype(cd)                   # (O, 1)
    b2 = b2_ref[...].astype(cd)                   # (O, 1)
    c2 = w2.shape[1]

    # Branch 1: 1-channel conv = outer product (O,1)*(1,T) on the VPU.
    y1 = w1 * x[0:1, :]                           # (O, T)

    # Branch 2: (C-1)-channel conv.
    if use_mxu and c2 > 1:
        # bf16 on compute-bound chips (v7x): one MXU matmul per tile replaces
        # ~2*C2 VALU ops/element and frees the saturating VALU slot.
        y2 = jnp.dot(w2, x[1:, :], preferred_element_type=jnp.float32).astype(cd)
    else:
        # K is tiny, so the MXU would be <2% utilized; unrolled VPU broadcast
        # FMAs are strictly cheaper in the f32 / mem-bound regime.
        y2 = w2[:, 0:1] * x[1:2, :]               # (O, T)
        for c in range(1, c2):
            y2 = y2 + w2[:, c:c + 1] * x[c + 1:c + 2, :]
    y2 = y2 + b2
    # leaky_relu(z) == max(z, slope*z) for 0 < slope < 1: mul+max (2 VALU ops).
    y2 = jnp.maximum(y2, NEG_SLOPE * y2)

    out = y1 + y2 + b1
    o_ref[...] = out.astype(o_ref.dtype)


def feat_conv(x, w1, b1, w2, b2, *, tile_t=32768, compute_dtype=None,
              vmem_budget_bytes=48 * (1 << 20)):
    """x: (N, C, H, W).  w1: (1, O), w2: (C-1, O), b1/b2: (O,).  Returns NCHW (N, O, H, W)."""
    N, C, H, W = x.shape
    O = w1.shape[1]
    C2 = C - 1
    # Guard the degenerate config (Conv2d with in_channels == 0 is not a valid module).
    assert C2 >= 1, "FeatConv requires at least one feat2 channel (C >= 2)."
    assert w2.shape == (C2, O) and b1.shape == (O,) and b2.shape == (O,)
    HW = H * W

    if compute_dtype is None:
        # bf16 activations -> bf16 compute (native on v6e/v7x VPUs, halves VALU
        # work and output bytes); otherwise f32.
        compute_dtype = jnp.bfloat16 if x.dtype == jnp.bfloat16 else jnp.float32
    use_mxu = (compute_dtype == jnp.bfloat16)

    # Free reshape: stays in NCHW order, pixels on the lane axis.
    x_flat = x.reshape(N, C, HW)

    # Channel-major weight/bias layouts so the kernel writes (O, T) blocks
    # directly into the NCHW output.  These are tiny (O*C floats) and resident.
    w1t = w1.T.reshape(O, 1)
    w2t = w2.T                                     # (O, C2)
    b1c = b1.reshape(O, 1)
    b2c = b2.reshape(O, 1)

    # --- Pixel-axis tiling -------------------------------------------------
    itemsize = jnp.dtype(x.dtype).itemsize
    # Double-buffered VMEM footprint per pixel of tile (input + output blocks).
    per_px = 2 * (C + O) * itemsize
    max_tile = max(128, (vmem_budget_bytes // per_px) // 128 * 128)
    tile = _round_up(min(tile_t, max_tile, _round_up(HW, 128)), 128)
    # Keep >= 2 grid steps so both v7x TensorCores get work ('parallel' axes).
    if N * pl.cdiv(HW, tile) < 2 and HW > 128:
        tile = _round_up(pl.cdiv(HW, 2), 128)
    grid = (N, pl.cdiv(HW, tile))

    # Raise scoped VMEM so large tiles still compile on v5e (16 MiB default);
    # stay within v7x's 64 MiB physical VMEM.
    vmem_need = per_px * tile + (1 << 20)
    vmem_limit = int(min(max(vmem_need * 5 // 4, 32 * (1 << 20)), 64 * (1 << 20)))

    cost = pl.CostEstimate(
        flops=2 * N * HW * O * C + 4 * N * HW * O,
        transcendentals=0,
        bytes_accessed=N * HW * (C + O) * itemsize
        + (O * C + 2 * O) * jnp.dtype(w1.dtype).itemsize,
    )

    kernel = functools.partial(_featconv_kernel,
                               compute_dtype=compute_dtype, use_mxu=use_mxu)

    out_flat = pl.pallas_call(
        kernel,
        out_shape=jax.ShapeDtypeStruct((N, O, HW), x.dtype),
        grid=grid,
        in_specs=[
            pl.BlockSpec((None, C, tile), lambda n, t: (n, 0, t)),   # x tile (C, T)
            pl.BlockSpec((O, 1), lambda n, t: (0, 0)),               # w1^T (resident)
            pl.BlockSpec((O, C2), lambda n, t: (0, 0)),              # w2^T (resident)
            pl.BlockSpec((O, 1), lambda n, t: (0, 0)),               # b1
            pl.BlockSpec((O, 1), lambda n, t: (0, 0)),               # b2
        ],
        out_specs=pl.BlockSpec((None, O, tile), lambda n, t: (n, 0, t)),
        compiler_params=pltpu.CompilerParams(
            dimension_semantics=("parallel", "parallel"),
            vmem_limit_bytes=vmem_limit),
        cost_estimate=cost,
    )(x_flat, w1t, w2t, b1c, b2c)

    return out_flat.reshape(N, O, H, W)


if __name__ == "__main__":
    key = jax.random.PRNGKey(0)
    k_x, k_w1, k_b1, k_w2, k_b2 = jax.random.split(key, 5)

    # Module config: feat1_in_channels=1, feat2_in_channels=C-1, out_channels=32
    N, C, H, W = 2, 4, 16, 16
    OUT = 32

    x = jax.random.normal(k_x, (N, C, H, W), dtype=jnp.float32)

    # PyTorch Conv2d weight is (out, in, 1, 1); we store the matmul form (in, out).
    w1 = jax.random.normal(k_w1, (1, OUT), dtype=jnp.float32) * 0.1
    b1 = jax.random.normal(k_b1, (OUT,), dtype=jnp.float32) * 0.1
    w2 = jax.random.normal(k_w2, (C - 1, OUT), dtype=jnp.float32) * 0.1
    b2 = jax.random.normal(k_b2, (OUT,), dtype=jnp.float32) * 0.1

    out = feat_conv(x, w1, b1, w2, b2)
    out = jax.block_until_ready(out)

    # Pure-JAX reference of the PyTorch forward pass.
    x_nhwc = jnp.transpose(x, (0, 2, 3, 1))
    y1_ref = x_nhwc[..., :1] @ w1 + b1
    y2_ref = x_nhwc[..., 1:] @ w2 + b2
    y2_ref = jnp.where(y2_ref > 0, y2_ref, NEG_SLOPE * y2_ref)
    ref = jnp.transpose(y1_ref + y2_ref, (0, 3, 1, 2))

    assert out.shape == (N, OUT, H, W)
    assert jnp.allclose(out, ref, atol=1e-5, rtol=1e-5)
    print("KERNEL_OK")
</pallas_src>

<mosaic_0001>
module attributes {stable_mosaic.version = 11 : i64} {
  func.func @_featconv_kernel(%arg0: i32, %arg1: i32, %arg2: memref<1x4x256xf32, #tpu.memory_space<vmem>>, %arg3: memref<32x1xf32, #tpu.memory_space<vmem>>, %arg4: memref<32x3xf32, #tpu.memory_space<vmem>>, %arg5: memref<32x1xf32, #tpu.memory_space<vmem>>, %arg6: memref<32x1xf32, #tpu.memory_space<vmem>>, %arg7: memref<1x32x256xf32, #tpu.memory_space<vmem>>) attributes {dimension_semantics = [#tpu.dimension_semantics<parallel>, #tpu.dimension_semantics<parallel>], iteration_bounds = array<i64: 2, 1>, scalar_prefetch = 0 : i64, scratch_operands = 0 : i64, tpu.core_type = #tpu.core_type<tc>, window_params = [{transform_indices = @transform_0, window_bounds = array<i64: 1, 4, 256>}, {pipeline_mode = #tpu.pipeline_mode<synchronous>, transform_indices = @transform_1, window_bounds = array<i64: 32, 1>}, {pipeline_mode = #tpu.pipeline_mode<synchronous>, transform_indices = @transform_2, window_bounds = array<i64: 32, 3>}, {pipeline_mode = #tpu.pipeline_mode<synchronous>, transform_indices = @transform_3, window_bounds = array<i64: 32, 1>}, {pipeline_mode = #tpu.pipeline_mode<synchronous>, transform_indices = @transform_4, window_bounds = array<i64: 32, 1>}, {transform_indices = @transform_5, window_bounds = array<i64: 1, 32, 256>}]} {
    %c0 = arith.constant 0 : index
    %c0_0 = arith.constant 0 : index
    %c0_1 = arith.constant 0 : index
    %0 = vector.load %arg2[%c0, %c0_0, %c0_1] : memref<1x4x256xf32, #tpu.memory_space<vmem>>, vector<1x4x256xf32>
    %1 = vector.shape_cast %0 : vector<1x4x256xf32> to vector<4x256xf32>
    %c0_2 = arith.constant 0 : index
    %c0_3 = arith.constant 0 : index
    %2 = vector.load %arg3[%c0_2, %c0_3] : memref<32x1xf32, #tpu.memory_space<vmem>>, vector<32x1xf32>
    %c0_4 = arith.constant 0 : index
    %c0_5 = arith.constant 0 : index
    %3 = vector.load %arg4[%c0_4, %c0_5] : memref<32x3xf32, #tpu.memory_space<vmem>>, vector<32x3xf32>
    %c0_6 = arith.constant 0 : index
    %c0_7 = arith.constant 0 : index
    %4 = vector.load %arg5[%c0_6, %c0_7] : memref<32x1xf32, #tpu.memory_space<vmem>>, vector<32x1xf32>
    %c0_8 = arith.constant 0 : index
    %c0_9 = arith.constant 0 : index
    %5 = vector.load %arg6[%c0_8, %c0_9] : memref<32x1xf32, #tpu.memory_space<vmem>>, vector<32x1xf32>
    %6 = vector.extract_strided_slice %1 {offsets = [0, 0], sizes = [1, 256], strides = [1, 1]} : vector<4x256xf32> to vector<1x256xf32>
    %7 = vector.broadcast %2 : vector<32x1xf32> to vector<32x256xf32>
    %8 = vector.broadcast %6 : vector<1x256xf32> to vector<32x256xf32>
    %9 = arith.mulf %7, %8 : vector<32x256xf32>
    %10 = vector.extract_strided_slice %3 {offsets = [0, 0], sizes = [32, 1], strides = [1, 1]} : vector<32x3xf32> to vector<32x1xf32>
    %11 = vector.extract_strided_slice %1 {offsets = [1, 0], sizes = [1, 256], strides = [1, 1]} : vector<4x256xf32> to vector<1x256xf32>
    %12 = vector.broadcast %10 : vector<32x1xf32> to vector<32x256xf32>
    %13 = vector.broadcast %11 : vector<1x256xf32> to vector<32x256xf32>
    %14 = arith.mulf %12, %13 : vector<32x256xf32>
    %15 = vector.extract_strided_slice %3 {offsets = [0, 1], sizes = [32, 1], strides = [1, 1]} : vector<32x3xf32> to vector<32x1xf32>
    %16 = vector.extract_strided_slice %1 {offsets = [2, 0], sizes = [1, 256], strides = [1, 1]} : vector<4x256xf32> to vector<1x256xf32>
    %17 = vector.broadcast %15 : vector<32x1xf32> to vector<32x256xf32>
    %18 = vector.broadcast %16 : vector<1x256xf32> to vector<32x256xf32>
    %19 = arith.mulf %17, %18 : vector<32x256xf32>
    %20 = arith.addf %14, %19 : vector<32x256xf32>
    %21 = vector.extract_strided_slice %3 {offsets = [0, 2], sizes = [32, 1], strides = [1, 1]} : vector<32x3xf32> to vector<32x1xf32>
    %22 = vector.extract_strided_slice %1 {offsets = [3, 0], sizes = [1, 256], strides = [1, 1]} : vector<4x256xf32> to vector<1x256xf32>
    %23 = vector.broadcast %21 : vector<32x1xf32> to vector<32x256xf32>
    %24 = vector.broadcast %22 : vector<1x256xf32> to vector<32x256xf32>
    %25 = arith.mulf %23, %24 : vector<32x256xf32>
    %26 = arith.addf %20, %25 : vector<32x256xf32>
    %27 = vector.broadcast %5 : vector<32x1xf32> to vector<32x256xf32>
    %28 = arith.addf %26, %27 : vector<32x256xf32>
    %cst = arith.constant 0.00999999977 : f32
    %29 = vector.broadcast %cst : f32 to vector<32x256xf32>
    %30 = arith.mulf %29, %28 : vector<32x256xf32>
    %31 = arith.maximumf %28, %30 : vector<32x256xf32>
    %32 = arith.addf %9, %31 : vector<32x256xf32>
    %33 = vector.broadcast %4 : vector<32x1xf32> to vector<32x256xf32>
    %34 = arith.addf %32, %33 : vector<32x256xf32>
    %c0_10 = arith.constant 0 : index
    %c0_11 = arith.constant 0 : index
    %c0_12 = arith.constant 0 : index
    %35 = vector.load %arg7[%c0_10, %c0_11, %c0_12] : memref<1x32x256xf32, #tpu.memory_space<vmem>>, vector<1x32x256xf32>
    %36 = vector.shape_cast %35 : vector<1x32x256xf32> to vector<32x256xf32>
    %37 = vector.shape_cast %34 : vector<32x256xf32> to vector<1x32x256xf32>
    tpu.vector_store %arg7[%c0_10, %c0_11, %c0_12], %37 {strides = array<i32>} : memref<1x32x256xf32, #tpu.memory_space<vmem>>, vector<1x32x256xf32>,
    return
  }
  func.func @transform_0(%arg0: i32, %arg1: i32) -> (i32, i32, i32) {
    %c0_i32 = arith.constant 0 : i32
    %c0_i32_0 = arith.constant 0 : i32
    return %arg0, %c0_i32, %arg1 : i32, i32, i32
  }
  func.func @transform_1(%arg0: i32, %arg1: i32) -> (i32, i32) {
    %c0_i32 = arith.constant 0 : i32
    %c0_i32_0 = arith.constant 0 : i32
    %c0_i32_1 = arith.constant 0 : i32
    return %c0_i32, %c0_i32_0 : i32, i32
  }
  func.func @transform_2(%arg0: i32, %arg1: i32) -> (i32, i32) {
    %c0_i32 = arith.constant 0 : i32
    %c0_i32_0 = arith.constant 0 : i32
    %c0_i32_1 = arith.constant 0 : i32
    return %c0_i32, %c0_i32_0 : i32, i32
  }
  func.func @transform_3(%arg0: i32, %arg1: i32) -> (i32, i32) {
    %c0_i32 = arith.constant 0 : i32
    %c0_i32_0 = arith.constant 0 : i32
    %c0_i32_1 = arith.constant 0 : i32
    return %c0_i32, %c0_i32_0 : i32, i32
  }
  func.func @transform_4(%arg0: i32, %arg1: i32) -> (i32, i32) {
    %c0_i32 = arith.constant 0 : i32
    %c0_i32_0 = arith.constant 0 : i32
    %c0_i32_1 = arith.constant 0 : i32
    return %c0_i32, %c0_i32_0 : i32, i32
  }
  func.func @transform_5(%arg0: i32, %arg1: i32) -> (i32, i32, i32) {
    %c0_i32 = arith.constant 0 : i32
    %c0_i32_0 = arith.constant 0 : i32
    return %arg0, %c0_i32, %arg1 : i32, i32, i32
  }
}

</mosaic_0001>

<llo_original>
// kernel: tpu_custom_call.1
$region0: #{tpu_custom_call.1}
  #allocation0 [shape = 'u32[]', space=smem, size = 0x4, offset = 0x4, fixed_abs, tag = 'smem constant byte address 0x4 - core index']
  #allocation1 [shape = 'u32[144,128]{1,0:T(1,128)}', space=vmem, size = 0x12000, scoped, tag = 'internal scratch']
  %s0 = inlined_call_operand.vmem [shape: f32[2,4,256], index: 0, kind: input, shape index: {}]
  %s1 = inlined_call_operand.vmem [shape: f32[32,1], index: 1, kind: input, shape index: {}]
  %s2 = inlined_call_operand.vmem [shape: f32[32,3], index: 2, kind: input, shape index: {}]
  %s3 = inlined_call_operand.vmem [shape: f32[32,1], index: 3, kind: input, shape index: {}]
  %s4 = inlined_call_operand.vmem [shape: f32[32,1], index: 4, kind: input, shape index: {}]
  %s5 = inlined_call_operand.hbm [shape: f32[2,32,256], index: 5, kind: output, shape index: {}]
  %s6 = sld [smem:[#allocation0]]
  $region53: #{tpu_custom_call.1} parent=0
    _
  %s8 = ssub.s32 1, %s6
  %s9 = scalar_select 0, %s8, %s6
  $region1: #{tpu_custom_call.1} parent=0
    #allocation2 [shape = 'u8[65536]{0}', space=vmem, size = 0x10000, scoped, tag = 'output window, operand 0']
    #allocation3 [shape = 's32[2]{0}', space=sflag, size = 0x8, scoped, tag = 'scoped memory for tpu_custom_call.1']
    %10 = vsyncpa [#allocation3], 0
    %s11 = scalar_lea.sflag [#allocation3], 1
    %12 = vsyncpa %s11, 0
    loop: start=0, step=1, limit=4
    $region2: #{tpu_custom_call.1} parent=1 // loop_pre_header
      _
    $region3: #{tpu_custom_call.1} parent=1 // loop_header
      %s14 = sphi 0, %s18
      %p15 = scmp.ge.s32.totalorder %s14, 4
      %s21 = sphi 0, %s33
      %s22 = sphi 0, %s29
      %s23 = sphi 0, %s21
      %s24 = sphi 0, %s22
      %s25 = sphi 0, %s23
      %s26 = sphi 0, %s24
      %s38 = sphi 0, %s40
      %s41 = sphi 0, %s38
      %s42 = sphi 0, %s41
      %s58 = sphi 0, %s42
      %s62 = sphi 0, %s62
      %s64 = sphi 0, %s62
      %s65 = sphi 0, %s64
      %s79 = sphi 0, %s65
      %s83 = sphi 0, %s83
      %s85 = sphi 0, %s83
      %s86 = sphi 0, %s85
      %s100 = sphi 0, %s86
      %s104 = sphi 0, %s104
      %s106 = sphi 0, %s104
      %s107 = sphi 0, %s106
      %s121 = sphi 0, %s107
      %s125 = sphi 0, %s125
      %s127 = sphi 0, %s125
      %s128 = sphi 0, %s127
      %s142 = sphi 0, %s128
      %s150 = sphi 0, %s152
      %s153 = sphi 0, %s150
      %s154 = sphi 0, %s153
      %s170 = sphi 0, %s154
    $region4: #{tpu_custom_call.1} parent=1 // loop_header_branch
      %17 = sbr.rel (%p15) target = $region8
    $region5: #{tpu_custom_call.1} parent=1 // loop_body
      %s19 = ssub.s32 %s14, 1
      %s20 = ssub.s32 %s14, 2
      %s27 = sadd.s32 1, %s22
      %p28 = scmp.ge.s32.totalorder %s27, 1
      %s29 = scalar_select %p28, 0, %s27
      %s30 = sadd.s32 1, %s21
      %s31 = scalar_select %p28, %s30, %s21
      %p32 = scmp.ge.s32.totalorder %s31, 2
      %s33 = scalar_select %p32, 0, %s31
      %s34 = ssub.s32 %s21, %s33
      %s35 = ssub.s32 %s22, %s29
      %s36 = sor.u32 %s34, %s35
      %p37 = scmp.eq.s32.totalorder %s36, 0
      %s39 = sadd.s32 %s38, 1
      %s40 = scalar_select %p37, %s38, %s39
      %p43 = pneg %p37
      %p44 = scmp.eq.s32.totalorder %s14, 1
      %p45 = por %p43, %p44
      %p46 = scmp.ne.s32.totalorder %s38, %s41
      %p47 = scmp.eq.s32.totalorder %s14, 0
      %p48 = por %p46, %p47
      %p49 = scmp.ne.s32.totalorder %s38, %s41
      %p50 = scmp.eq.s32.totalorder %s19, 1
      %p51 = por %p49, %p50
      %p52 = scmp.ne.s32.totalorder %s41, %s42
      %p53 = scmp.eq.s32.totalorder %s19, 0
      %p54 = por %p52, %p53
      %p55 = scmp.ne.s32.totalorder %s41, %s42
      %p56 = scmp.eq.s32.totalorder %s20, 1
      %p57 = por %p55, %p56
      %p59 = scmp.ne.s32.totalorder %s42, %s58
      %p60 = scmp.eq.s32.totalorder %s20, 0
      %p61 = por %p59, %p60
      %s63 = sadd.s32 %s62, 1
      %p66 = scmp.eq.s32.totalorder %s14, 1
      %p67 = scmp.ne.s32.totalorder %s62, %s64
      %p68 = scmp.eq.s32.totalorder %s14, 0
      %p69 = por %p67, %p68
      %p70 = scmp.ne.s32.totalorder %s62, %s64
      %p71 = scmp.eq.s32.totalorder %s19, 1
      %p72 = por %p70, %p71
      %p73 = scmp.ne.s32.totalorder %s64, %s65
      %p74 = scmp.eq.s32.totalorder %s19, 0
      %p75 = por %p73, %p74
      %p76 = scmp.ne.s32.totalorder %s64, %s65
      %p77 = scmp.eq.s32.totalorder %s20, 1
      %p78 = por %p76, %p77
      %p80 = scmp.ne.s32.totalorder %s65, %s79
      %p81 = scmp.eq.s32.totalorder %s20, 0
      %p82 = por %p80, %p81
      %s84 = sadd.s32 %s83, 1
      %p87 = scmp.eq.s32.totalorder %s14, 1
      %p88 = scmp.ne.s32.totalorder %s83, %s85
      %p89 = scmp.eq.s32.totalorder %s14, 0
      %p90 = por %p88, %p89
      %p91 = scmp.ne.s32.totalorder %s83, %s85
      %p92 = scmp.eq.s32.totalorder %s19, 1
      %p93 = por %p91, %p92
      %p94 = scmp.ne.s32.totalorder %s85, %s86
      %p95 = scmp.eq.s32.totalorder %s19, 0
      %p96 = por %p94, %p95
      %p97 = scmp.ne.s32.totalorder %s85, %s86
      %p98 = scmp.eq.s32.totalorder %s20, 1
      %p99 = por %p97, %p98
      %p101 = scmp.ne.s32.totalorder %s86, %s100
      %p102 = scmp.eq.s32.totalorder %s20, 0
      %p103 = por %p101, %p102
      %s105 = sadd.s32 %s104, 1
      %p108 = scmp.eq.s32.totalorder %s14, 1
      %p109 = scmp.ne.s32.totalorder %s104, %s106
      %p110 = scmp.eq.s32.totalorder %s14, 0
      %p111 = por %p109, %p110
      %p112 = scmp.ne.s32.totalorder %s104, %s106
      %p113 = scmp.eq.s32.totalorder %s19, 1
      %p114 = por %p112, %p113
      %p115 = scmp.ne.s32.totalorder %s106, %s107
      %p116 = scmp.eq.s32.totalorder %s19, 0
      %p117 = por %p115, %p116
      %p118 = scmp.ne.s32.totalorder %s106, %s107
      %p119 = scmp.eq.s32.totalorder %s20, 1
      %p120 = por %p118, %p119
      %p122 = scmp.ne.s32.totalorder %s107, %s121
      %p123 = scmp.eq.s32.totalorder %s20, 0
      %p124 = por %p122, %p123
      %s126 = sadd.s32 %s125, 1
      %p129 = scmp.eq.s32.totalorder %s14, 1
      %p130 = scmp.ne.s32.totalorder %s125, %s127
      %p131 = scmp.eq.s32.totalorder %s14, 0
      %p132 = por %p130, %p131
      %p133 = scmp.ne.s32.totalorder %s125, %s127
      %p134 = scmp.eq.s32.totalorder %s19, 1
      %p135 = por %p133, %p134
      %p136 = scmp.ne.s32.totalorder %s127, %s128
      %p137 = scmp.eq.s32.totalorder %s19, 0
      %p138 = por %p136, %p137
      %p139 = scmp.ne.s32.totalorder %s127, %s128
      %p140 = scmp.eq.s32.totalorder %s20, 1
      %p141 = por %p139, %p140
      %p143 = scmp.ne.s32.totalorder %s128, %s142
      %p144 = scmp.eq.s32.totalorder %s20, 0
      %p145 = por %p143, %p144
      %s146 = ssub.s32 %s21, %s33
      %s147 = ssub.s32 %s22, %s29
      %s148 = sor.u32 %s146, %s147
      %p149 = scmp.eq.s32.totalorder %s148, 0
      %s151 = sadd.s32 %s150, 1
      %s152 = scalar_select %p149, %s150, %s151
      %p155 = pneg %p149
      %p156 = scmp.eq.s32.totalorder %s14, 1
      %p157 = por %p155, %p156
      %p158 = scmp.ne.s32.totalorder %s150, %s153
      %p159 = scmp.eq.s32.totalorder %s14, 0
      %p160 = por %p158, %p159
      %p161 = scmp.ne.s32.totalorder %s150, %s153
      %p162 = scmp.eq.s32.totalorder %s19, 1
      %p163 = por %p161, %p162
      %p164 = scmp.ne.s32.totalorder %s153, %s154
      %p165 = scmp.eq.s32.totalorder %s19, 0
      %p166 = por %p164, %p165
      %p167 = scmp.ne.s32.totalorder %s153, %s154
      %p168 = scmp.eq.s32.totalorder %s20, 1
      %p169 = por %p167, %p168
      %p171 = scmp.ne.s32.totalorder %s154, %s170
      %p172 = scmp.eq.s32.totalorder %s20, 0
      %p173 = por %p171, %p172
      %p174 = scmp.le.s32.totalorder 1, %s14
      %p175 = scmp.lt.s32.totalorder %s14, 3
      %p176 = pnand %p174, %p175
      %p177 = pneg %p176
      // Predicated region
      $region9: #{tpu_custom_call.1} parent=5 // pred_check
        _
      $region10: #{tpu_custom_call.1} parent=5 // pred_check_branch
        %179 = sbr.rel (%p176) target = $region12
      $region11: #{tpu_custom_call.1} parent=5 // pred_region
        %s180 = ssub.s32 %s14, 1
        // Predicated region
        $region13: #{tpu_custom_call.1} parent=11 // pred_check
          %p181 = pneg %p75
        $region14: #{tpu_custom_call.1} parent=11 // pred_check_branch
          %183 = sbr.rel (%p181) target = $region16
        $region15: #{tpu_custom_call.1} parent=11 // pred_region
          _
        $region16: #{tpu_custom_call.1} parent=11 // pred_fallthru
          _
        // Predicated region
        $region17: #{tpu_custom_call.1} parent=11 // pred_check
          %p184 = pneg %p96
        $region18: #{tpu_custom_call.1} parent=11 // pred_check_branch
          %186 = sbr.rel (%p184) target = $region20
        $region19: #{tpu_custom_call.1} parent=11 // pred_region
          _
        $region20: #{tpu_custom_call.1} parent=11 // pred_fallthru
          _
        // Predicated region
        $region21: #{tpu_custom_call.1} parent=11 // pred_check
          %p187 = pneg %p117
        $region22: #{tpu_custom_call.1} parent=11 // pred_check_branch
          %189 = sbr.rel (%p187) target = $region24
        $region23: #{tpu_custom_call.1} parent=11 // pred_region
          _
        $region24: #{tpu_custom_call.1} parent=11 // pred_fallthru
          _
        // Predicated region
        $region25: #{tpu_custom_call.1} parent=11 // pred_check
          %p190 = pneg %p138
        $region26: #{tpu_custom_call.1} parent=11 // pred_check_branch
          %192 = sbr.rel (%p190) target = $region28
        $region27: #{tpu_custom_call.1} parent=11 // pred_region
          _
        $region28: #{tpu_custom_call.1} parent=11 // pred_fallthru
          _
      $region12: #{tpu_custom_call.1} parent=5 // pred_fallthru
        _
      %p193 = scmp.lt.s32.totalorder %s14, 2
      // Predicated region
      $region29: #{tpu_custom_call.1} parent=5 // pred_check
        %p194 = pneg %p193
      $region30: #{tpu_custom_call.1} parent=5 // pred_check_branch
        %196 = sbr.rel (%p194) target = $region32
      $region31: #{tpu_custom_call.1} parent=5 // pred_region
        // Predicated region
        $region33: #{tpu_custom_call.1} parent=31 // pred_check
          %p197 = pneg %p48
        $region34: #{tpu_custom_call.1} parent=31 // pred_check_branch
          %199 = sbr.rel (%p197) target = $region36
        $region35: #{tpu_custom_call.1} parent=31 // pred_region
          %s200 = smul.u32 2, %s22
          %p201 = scmp.lt.s32.totalorder %s21, 1
          %s202 = scalar_select %p201, %s21, 1
          %p203 = scmp.lt.s32.totalorder %s200, 1
          %s204 = scalar_select %p203, %s200, 1
          %s205 = smul.addr %s202, 2
          %s206 = sadd.s32 %s204, %s205
          %s207 = smul.addr %s206, 4
          %s208 = scalar_lea.vmem %s0, %s207
          %s209 = smul.u32 2, %s22
        $region36: #{tpu_custom_call.1} parent=31 // pred_fallthru
          _
      $region32: #{tpu_custom_call.1} parent=5 // pred_fallthru
        _
      %p210 = scmp.le.s32.totalorder 1, %s14
      %p211 = scmp.lt.s32.totalorder %s14, 3
      %p212 = pnand %p210, %p211
      %p213 = pneg %p212
      // Predicated region
      $region37: #{tpu_custom_call.1} parent=5 // pred_check
        _
      $region38: #{tpu_custom_call.1} parent=5 // pred_check_branch
        %215 = sbr.rel (%p212) target = $region40
      $region39: #{tpu_custom_call.1} parent=5 // pred_region
        %s216 = ssub.s32 %s14, 1
        %s217 = smul.u32 2, %s24
        %p218 = scmp.lt.s32.totalorder %s23, 1
        %s219 = scalar_select %p218, %s23, 1
        %p220 = scmp.lt.s32.totalorder %s217, 1
        %s221 = scalar_select %p220, %s217, 1
        %s222 = smul.addr %s219, 2
        %s223 = sadd.s32 %s221, %s222
        %s224 = smul.addr %s223, 4
        %s225 = scalar_lea.vmem %s0, %s224
        %p226 = pneg %p54
        %p227 = pneg %p51
        %p228 = pneg %p75
        %p229 = pneg %p72
        %p230 = pneg %p96
        %p231 = pneg %p93
        %p232 = pneg %p117
        %p233 = pneg %p114
        %p234 = pneg %p138
        %p235 = pneg %p135
        %p236 = pneg %p166
        %p237 = pneg %p163
        %s238 = sand.u32 %s153, 1
        %s239 = scalar_lea.sflag [#allocation3], %s238
        %s240 = sand.u32 %s153, 1
        %s241 = smul.addr %s240, 64
        %s242 = scalar_lea.vmem [#allocation2], %s241
        %s243 = smul.u32 2, %s24
        %p244 = scmp.lt.s32.totalorder %s23, 1
        %s245 = scalar_select %p244, %s23, 1
        %p246 = scmp.lt.s32.totalorder %s243, 1
        %s247 = scalar_select %p246, %s243, 1
        %s248 = smul.addr %s245, 2
        %s249 = sadd.s32 %s247, %s248
        %s250 = smul.addr %s249, 4
        %s251 = scalar_lea.vmem %s0, %s250
        %s252 = smul.u32 2, %s24
        %s253 = smul.u32 2, %s24
        %v254 = vld [vmem:[%s251] sm:$0xff]
        %v255 = vld [vmem:[%s1] sm:$0xff]
        %v256 = vld [vmem:[%s1 + $0x8] sm:$0xff]
        %v257 = vld [vmem:[%s1 + $0x10] sm:$0xff]
        %v258 = vld [vmem:[%s1 + $0x18] sm:$0xff]
        %v259 = vld [vmem:[%s2] sm:$0xff]
        %v260 = vld [vmem:[%s2 + $0x8] sm:$0xff]
        %v261 = vld [vmem:[%s2 + $0x10] sm:$0xff]
        %v262 = vld [vmem:[%s2 + $0x18] sm:$0xff]
        %v263 = vld [vmem:[%s3] sm:$0xff]
        %v264 = vld [vmem:[%s3 + $0x8] sm:$0xff]
        %v265 = vld [vmem:[%s3 + $0x10] sm:$0xff]
        %v266 = vld [vmem:[%s3 + $0x18] sm:$0xff]
        %v267 = vld [vmem:[%s4] sm:$0xff]
        %v268 = vld [vmem:[%s4 + $0x8] sm:$0xff]
        %v269 = vld [vmem:[%s4 + $0x10] sm:$0xff]
        %v270 = vld [vmem:[%s4 + $0x18] sm:$0xff]
        %272 = vset.pattern.permute.xlu0 0
        %273 = vperm.xlu0 %272, %v255
        %v274 = vpop.permute.xlu0 %273
        %277 = vset.pattern.permute.xlu0 0
        %278 = vperm.xlu0 %277, %v256
        %v279 = vpop.permute.xlu0 %278
        %282 = vset.pattern.permute.xlu0 0
        %283 = vperm.xlu0 %282, %v257
        %v284 = vpop.permute.xlu0 %283
        %287 = vset.pattern.permute.xlu0 0
        %288 = vperm.xlu0 %287, %v258
        %v289 = vpop.permute.xlu0 %288
        %v292 = vlaneseq
        %v293 = vshrl.u32 %v292, 7
        %v294 = vsub.s32 0, %v293
        %v295 = vrot.slane %v254, %v294
        %v296 = vlaneseq
        %v297 = vshrl.u32 %v296, 7
        %v298 = vsub.s32 4, %v297
        %v299 = vrot.slane %v254, %v298
        %v302 = vlaneseq
        %v303 = vshrl.u32 %v302, 7
        %v304 = vsub.s32 0, %v303
        %v305 = vrot.slane %v295, %v304
        %v306 = vlaneseq
        %v307 = vshrl.u32 %v306, 7
        %v308 = vsub.s32 0, %v307
        %v309 = vrot.slane %v299, %v308
        %v310 = vmul.f32 %v274, %v305
        %v311 = vmul.f32 %v274, %v309
        %v312 = vmul.f32 %v279, %v305
        %v313 = vmul.f32 %v279, %v309
        %v314 = vmul.f32 %v284, %v305
        %v315 = vmul.f32 %v284, %v309
        %v316 = vmul.f32 %v289, %v305
        %v317 = vmul.f32 %v289, %v309
        %319 = vset.pattern.permute.xlu0 0
        %320 = vperm.xlu0 %319, %v259
        %v321 = vpop.permute.xlu0 %320
        %324 = vset.pattern.permute.xlu0 0
        %325 = vperm.xlu0 %324, %v260
        %v326 = vpop.permute.xlu0 %325
        %329 = vset.pattern.permute.xlu0 0
        %330 = vperm.xlu0 %329, %v261
        %v331 = vpop.permute.xlu0 %330
        %334 = vset.pattern.permute.xlu0 0
        %335 = vperm.xlu0 %334, %v262
        %v336 = vpop.permute.xlu0 %335
        %v338 = vlaneseq
        %v339 = vshrl.u32 %v338, 7
        %v340 = vsub.s32 1, %v339
        %v341 = vrot.slane %v254, %v340
        %v342 = vlaneseq
        %v343 = vshrl.u32 %v342, 7
        %v344 = vsub.s32 5, %v343
        %v345 = vrot.slane %v254, %v344
        %v348 = vlaneseq
        %v349 = vshrl.u32 %v348, 7
        %v350 = vsub.s32 1, %v349
        %v351 = vrot.slane %v341, %v350
        %v352 = vlaneseq
        %v353 = vshrl.u32 %v352, 7
        %v354 = vsub.s32 1, %v353
        %v355 = vrot.slane %v345, %v354
        %v356 = vmul.f32 %v321, %v351
        %v357 = vmul.f32 %v321, %v355
        %v358 = vmul.f32 %v326, %v351
        %v359 = vmul.f32 %v326, %v355
        %v360 = vmul.f32 %v331, %v351
        %v361 = vmul.f32 %v331, %v355
        %v362 = vmul.f32 %v336, %v351
        %v363 = vmul.f32 %v336, %v355
        %364 = vset.pattern.permute.xlu0 1
        %365 = vperm.xlu0 %364, %v259
        %v366 = vpop.permute.xlu0 %365
        %368 = vset.pattern.permute.xlu0 1
        %369 = vperm.xlu0 %368, %v260
        %v370 = vpop.permute.xlu0 %369
        %372 = vset.pattern.permute.xlu0 1
        %373 = vperm.xlu0 %372, %v261
        %v374 = vpop.permute.xlu0 %373
        %376 = vset.pattern.permute.xlu0 1
        %377 = vperm.xlu0 %376, %v262
        %v378 = vpop.permute.xlu0 %377
        %v380 = vlaneseq
        %v381 = vshrl.u32 %v380, 7
        %v382 = vsub.s32 2, %v381
        %v383 = vrot.slane %v254, %v382
        %v384 = vlaneseq
        %v385 = vshrl.u32 %v384, 7
        %v386 = vsub.s32 6, %v385
        %v387 = vrot.slane %v254, %v386
        %v390 = vlaneseq
        %v391 = vshrl.u32 %v390, 7
        %v392 = vsub.s32 2, %v391
        %v393 = vrot.slane %v383, %v392
        %v394 = vlaneseq
        %v395 = vshrl.u32 %v394, 7
        %v396 = vsub.s32 2, %v395
        %v397 = vrot.slane %v387, %v396
        %v398 = vmul.f32 %v366, %v393
        %v399 = vmul.f32 %v366, %v397
        %v400 = vmul.f32 %v370, %v393
        %v401 = vmul.f32 %v370, %v397
        %v402 = vmul.f32 %v374, %v393
        %v403 = vmul.f32 %v374, %v397
        %v404 = vmul.f32 %v378, %v393
        %v405 = vmul.f32 %v378, %v397
        %v406 = vadd.f32 %v356, %v398
        %v407 = vadd.f32 %v357, %v399
        %v408 = vadd.f32 %v358, %v400
        %v409 = vadd.f32 %v359, %v401
        %v410 = vadd.f32 %v360, %v402
        %v411 = vadd.f32 %v361, %v403
        %v412 = vadd.f32 %v362, %v404
        %v413 = vadd.f32 %v363, %v405
        %414 = vset.pattern.permute.xlu0 2
        %415 = vperm.xlu0 %414, %v259
        %v416 = vpop.permute.xlu0 %415
        %418 = vset.pattern.permute.xlu0 2
        %419 = vperm.xlu0 %418, %v260
        %v420 = vpop.permute.xlu0 %419
        %422 = vset.pattern.permute.xlu0 2
        %423 = vperm.xlu0 %422, %v261
        %v424 = vpop.permute.xlu0 %423
        %426 = vset.pattern.permute.xlu0 2
        %427 = vperm.xlu0 %426, %v262
        %v428 = vpop.permute.xlu0 %427
        %v430 = vlaneseq
        %v431 = vshrl.u32 %v430, 7
        %v432 = vsub.s32 3, %v431
        %v433 = vrot.slane %v254, %v432
        %v434 = vlaneseq
        %v435 = vshrl.u32 %v434, 7
        %v436 = vsub.s32 7, %v435
        %v437 = vrot.slane %v254, %v436
        %v440 = vlaneseq
        %v441 = vshrl.u32 %v440, 7
        %v442 = vsub.s32 3, %v441
        %v443 = vrot.slane %v433, %v442
        %v444 = vlaneseq
        %v445 = vshrl.u32 %v444, 7
        %v446 = vsub.s32 3, %v445
        %v447 = vrot.slane %v437, %v446
        %v448 = vmul.f32 %v416, %v443
        %v449 = vmul.f32 %v416, %v447
        %v450 = vmul.f32 %v420, %v443
        %v451 = vmul.f32 %v420, %v447
        %v452 = vmul.f32 %v424, %v443
        %v453 = vmul.f32 %v424, %v447
        %v454 = vmul.f32 %v428, %v443
        %v455 = vmul.f32 %v428, %v447
        %v456 = vadd.f32 %v406, %v448
        %v457 = vadd.f32 %v407, %v449
        %v458 = vadd.f32 %v408, %v450
        %v459 = vadd.f32 %v409, %v451
        %v460 = vadd.f32 %v410, %v452
        %v461 = vadd.f32 %v411, %v453
        %v462 = vadd.f32 %v412, %v454
        %v463 = vadd.f32 %v413, %v455
        %465 = vset.pattern.permute.xlu0 0
        %466 = vperm.xlu0 %465, %v267
        %v467 = vpop.permute.xlu0 %466
        %470 = vset.pattern.permute.xlu0 0
        %471 = vperm.xlu0 %470, %v268
        %v472 = vpop.permute.xlu0 %471
        %475 = vset.pattern.permute.xlu0 0
        %476 = vperm.xlu0 %475, %v269
        %v477 = vpop.permute.xlu0 %476
        %480 = vset.pattern.permute.xlu0 0
        %481 = vperm.xlu0 %480, %v270
        %v482 = vpop.permute.xlu0 %481
        %v484 = vadd.f32 %v456, %v467
        %v485 = vadd.f32 %v457, %v467
        %v486 = vadd.f32 %v458, %v472
        %v487 = vadd.f32 %v459, %v472
        %v488 = vadd.f32 %v460, %v477
        %v489 = vadd.f32 %v461, %v477
        %v490 = vadd.f32 %v462, %v482
        %v491 = vadd.f32 %v463, %v482
        %v492 = vmul.f32 %v484, 0.01
        %v493 = vmul.f32 %v485, 0.01
        %v494 = vmul.f32 %v486, 0.01
        %v495 = vmul.f32 %v487, 0.01
        %v496 = vmul.f32 %v488, 0.01
        %v497 = vmul.f32 %v489, 0.01
        %v498 = vmul.f32 %v490, 0.01
        %v499 = vmul.f32 %v491, 0.01
        %v500 = vmax.f32 %v484, %v492
        %v501 = vmax.f32 %v485, %v493
        %v502 = vmax.f32 %v486, %v494
        %v503 = vmax.f32 %v487, %v495
        %v504 = vmax.f32 %v488, %v496
        %v505 = vmax.f32 %v489, %v497
        %v506 = vmax.f32 %v490, %v498
        %v507 = vmax.f32 %v491, %v499
        %v508 = vadd.f32 %v310, %v500
        %v509 = vadd.f32 %v311, %v501
        %v510 = vadd.f32 %v312, %v502
        %v511 = vadd.f32 %v313, %v503
        %v512 = vadd.f32 %v314, %v504
        %v513 = vadd.f32 %v315, %v505
        %v514 = vadd.f32 %v316, %v506
        %v515 = vadd.f32 %v317, %v507
        %517 = vset.pattern.permute.xlu0 0
        %518 = vperm.xlu0 %517, %v263
        %v519 = vpop.permute.xlu0 %518
        %522 = vset.pattern.permute.xlu0 0
        %523 = vperm.xlu0 %522, %v264
        %v524 = vpop.permute.xlu0 %523
        %527 = vset.pattern.permute.xlu0 0
        %528 = vperm.xlu0 %527, %v265
        %v529 = vpop.permute.xlu0 %528
        %532 = vset.pattern.permute.xlu0 0
        %533 = vperm.xlu0 %532, %v266
        %v534 = vpop.permute.xlu0 %533
        %v536 = vadd.f32 %v508, %v519
        %v537 = vadd.f32 %v509, %v519
        %v538 = vadd.f32 %v510, %v524
        %v539 = vadd.f32 %v511, %v524
        %v540 = vadd.f32 %v512, %v529
        %v541 = vadd.f32 %v513, %v529
        %v542 = vadd.f32 %v514, %v534
        %v543 = vadd.f32 %v515, %v534
        %544 = vst [vmem:[%s242] sm:$0xff] %v536
        %545 = vst [vmem:[%s242 + $0x8] sm:$0xff] %v537
        %546 = vst [vmem:[%s242 + $0x10] sm:$0xff] %v538
        %547 = vst [vmem:[%s242 + $0x18] sm:$0xff] %v539
        %548 = vst [vmem:[%s242 + $0x20] sm:$0xff] %v540
        %549 = vst [vmem:[%s242 + $0x28] sm:$0xff] %v541
        %550 = vst [vmem:[%s242 + $0x30] sm:$0xff] %v542
        %551 = vst [vmem:[%s242 + $0x38] sm:$0xff] %v543
        %s552 = sand.u32 %s153, 1
        %s553 = scalar_lea.sflag [#allocation3], %s552
        %s554 = sand.u32 %s153, 1
        %s555 = smul.addr %s554, 64
        %s556 = scalar_lea.vmem [#allocation2], %s555
        // Predicated region
        $region41: #{tpu_custom_call.1} parent=39 // pred_check
          %p557 = pneg %p163
        $region42: #{tpu_custom_call.1} parent=39 // pred_check_branch
          %559 = sbr.rel (%p557) target = $region44
        $region43: #{tpu_custom_call.1} parent=39 // pred_region
          %s560 = smul.u32 2, %s24
          %s562 = ssub.s32 1024, 1024
          %563 = vsyncadd %s553, %s562
          %s564 = smul.addr %s23, 8
          %s565 = sadd.s32 %s560, %s564
          %s566 = smul.addr %s565, 128
          %s567 = scalar_lea.hbm %s5, %s566
          %s568 = sshll.u32 %s556, 4
          %s569 = int_to_ptr.vmem [resolvable:$true] %s568
          %574 = dma.vmem_to_hbm [thread:$0]  %s569, 1024, %s567, %s553, 256, 256, 16
        $region44: #{tpu_custom_call.1} parent=39 // pred_fallthru
          _
      $region40: #{tpu_custom_call.1} parent=5 // pred_fallthru
        _
      %p575 = scmp.le.s32.totalorder 2, %s14
      // Predicated region
      $region45: #{tpu_custom_call.1} parent=5 // pred_check
        %p576 = pneg %p575
      $region46: #{tpu_custom_call.1} parent=5 // pred_check_branch
        %578 = sbr.rel (%p576) target = $region48
      $region47: #{tpu_custom_call.1} parent=5 // pred_region
        %s579 = ssub.s32 %s14, 2
        // Predicated region
        $region49: #{tpu_custom_call.1} parent=47 // pred_check
          %p580 = pneg %p169
        $region50: #{tpu_custom_call.1} parent=47 // pred_check_branch
          %582 = sbr.rel (%p580) target = $region52
        $region51: #{tpu_custom_call.1} parent=47 // pred_region
          %s583 = sand.u32 %s154, 1
          %s584 = scalar_lea.sflag [#allocation3], %s583
          %s585 = sand.u32 %s154, 1
          %s586 = smul.addr %s585, 64
          %s587 = scalar_lea.vmem [#allocation2], %s586
          %588 = dma.done %s584, 1024
        $region52: #{tpu_custom_call.1} parent=47 // pred_fallthru
          _
      $region48: #{tpu_custom_call.1} parent=5 // pred_fallthru
        _
    $region6: #{tpu_custom_call.1} parent=1 // loop_footer
      %s18 = sadd.s32 1, %s14
    $region7: #{tpu_custom_call.1} parent=1 // loop_footer_branch
      %13 = sbr.rel target = $region3
    $region8: #{tpu_custom_call.1} parent=1 // loop_exit
      _
    %589 = vsyncpa [#allocation3], 1
    %s590 = scalar_lea.sflag [#allocation3], 1
    %591 = vsyncpa %s590, 1

</llo_original>
